<compile_context>
chip_gen: v7x
topology: tpu7x:2x2x1
jax: 0.10.0
libtpu: 0.0.40
codegen_flags: <defaults>
</compile_context>

<pallas_src>
import functools

import jax
import jax.numpy as jnp
from jax.experimental import pallas as pl
from jax.experimental.pallas import tpu as pltpu


def _round_up(x, m):
    return ((x + m - 1) // m) * m


def _cdiv(a, b):
    return -(-a // b)


def _tpu_vmem_capacity_bytes():
    """Physical VMEM per TensorCore; conservative fallback (v7x = 64 MiB) on failure."""
    try:
        return int(pltpu.get_tpu_info().vmem_capacity_bytes)
    except Exception:
        return 64 << 20


def _usable_vmem_bytes():
    # Leave headroom for Mosaic internal scratch: ~104 MiB usable on 128 MiB parts
    # (v5e/v6e), ~40 MiB on 64 MiB parts (v7x).
    return max(32 << 20, _tpu_vmem_capacity_bytes() - (24 << 20))


def _num_tensorcores():
    """Best-effort TensorCores-per-chip query (v7x has 2); fall back to 1."""
    try:
        info = pltpu.get_tpu_info()
        for attr in ("num_cores", "tensorcores_per_chip", "num_tensorcores"):
            v = getattr(info, attr, None)
            if v:
                return min(2, max(1, int(v)))
    except Exception:
        pass
    try:
        d = jax.devices()[0]
        for attr in ("num_cores", "core_count"):
            v = getattr(d, attr, None)
            if v:
                return min(2, max(1, int(v)))
    except Exception:
        pass
    return 1


def _pick_block_b(batch, n_tc):
    """Batch-block rows: target 256 (fills 256x256 MXU), keep every TC busy."""
    if batch <= 8:
        return _round_up(max(batch, 1), 8)
    n_blocks = _cdiv(batch, 256)
    if n_tc >= 2 and batch >= 16:
        n_blocks = max(n_blocks, n_tc)  # >=2 "parallel" blocks so both TCs get work
    block_b = _round_up(_cdiv(batch, n_blocks), 8)
    return max(8, min(256, block_b))


def _fused_embedding_kernel(idx_ref, table_ref, out_ref, *, single_k):
    """Fused multi-feature embedding lookup via a multi-hot MXU matmul.

    idx_ref   : (block_b, F) int32       -- indices already shifted into the packed
                                            block-diagonal row space
    table_ref : (block_k, D_pad)         -- K chunk of the packed table
    out_ref   : (block_b, D_pad) f32     -- concatenated output (resident over K)
    """
    block_b, num_feat = idx_ref.shape
    block_k = table_ref.shape[0]

    idx = idx_ref[...]
    # Shift the (block_b, F) indices instead of the full (block_b, block_k) iota,
    # keeping the iota loop-invariant.
    local = idx if single_k else idx - pl.program_id(1) * block_k

    col = jax.lax.broadcasted_iota(jnp.int32, (block_b, block_k), 1)

    # Features own disjoint row ranges of the packed table, so OR of per-feature
    # one-hots is an exact multi-hot.  Single cast, no int32 intermediate.
    hits = col == local[:, 0:1]
    for f in range(1, num_feat):
        hits = jnp.logical_or(hits, col == local[:, f:f + 1])
    multi_hot = hits.astype(table_ref.dtype)

    prod = jnp.dot(multi_hot, table_ref[...], preferred_element_type=jnp.float32)

    if single_k:
        out_ref[...] = prod  # no zero-init, no read-modify-write
    else:
        @pl.when(pl.program_id(1) == 0)
        def _():
            out_ref[...] = jnp.zeros_like(out_ref)

        out_ref[...] += prod


def _entity_embeddings_forward(indices, big_table, row_offsets, max_idx, *,
                               out_dim, block_k, single_k, n_tc, usable_vmem):
    """indices: (batch, F) int ; big_table: (K_pad, D_pad) -> (batch, out_dim) f32."""
    batch, num_feat = indices.shape
    k_pad, d_pad = big_table.shape

    # Clamp per feature: PyTorch nn.Embedding would raise on OOB indices; clamping
    # keeps them from selecting another feature's rows in the packed table.
    idx = jnp.clip(indices.astype(jnp.int32), 0, max_idx[None, :])
    comb = idx + row_offsets[None, :].astype(jnp.int32)

    block_b = _pick_block_b(batch, n_tc)
    b_pad = _round_up(batch, block_b)
    if b_pad != batch:
        comb = jnp.pad(comb, ((0, b_pad - batch), (0, 0)), mode="edge")

    itemsize = big_table.dtype.itemsize
    table_bufs = 1 if single_k else 2
    vmem_need = (
        table_bufs * block_k * d_pad * itemsize          # table block(s)
        + 2 * block_b * _round_up(num_feat, 128) * 4     # index blocks (lane-padded)
        + 2 * block_b * d_pad * 4                        # output blocks
        + block_b * block_k * itemsize                   # multi-hot intermediate
    )

    params = {}
    if single_k:
        grid = (b_pad // block_b,)
        params["dimension_semantics"] = ("parallel",)
        idx_spec = pl.BlockSpec((block_b, num_feat), lambda i: (i, 0))
        out_spec = pl.BlockSpec((block_b, d_pad), lambda i: (i, 0))
        table_map = lambda i: (0, 0)
        # Resident table (constant block index): fetched from HBM once; no need to
        # double-buffer it, halving its VMEM footprint (matters on v7x's 64 MiB).
        try:
            table_spec = pl.BlockSpec((block_k, d_pad), table_map,
                                      pipeline_mode=pl.Buffered(1))
        except Exception:
            table_spec = pl.BlockSpec((block_k, d_pad), table_map)
    else:
        grid = (b_pad // block_b, k_pad // block_k)
        params["dimension_semantics"] = ("parallel", "arbitrary")
        idx_spec = pl.BlockSpec((block_b, num_feat), lambda i, k: (i, 0))
        out_spec = pl.BlockSpec((block_b, d_pad), lambda i, k: (i, 0))
        table_spec = pl.BlockSpec((block_k, d_pad), lambda i, k: (k, 0))

    if vmem_need > 12 * 1024 * 1024:
        params["vmem_limit_bytes"] = int(min(vmem_need + (8 << 20), usable_vmem))

    out_padded = pl.pallas_call(
        functools.partial(_fused_embedding_kernel, single_k=single_k),
        out_shape=jax.ShapeDtypeStruct((b_pad, d_pad), jnp.float32),
        grid=grid,
        in_specs=[idx_spec, table_spec],
        out_specs=out_spec,
        compiler_params=pltpu.CompilerParams(**params),
    )(comb, big_table)

    return out_padded[:batch, :out_dim]


class EntityEmbeddings:
    """JAX/Pallas port of torchtuples.practical.EntityEmbeddings (dropout=0)."""

    def __init__(self, num_embeddings, embedding_dims, dropout=0.0, *, key,
                 table_dtype=jnp.float32, block_k=None):
        if not hasattr(num_embeddings, "__iter__"):
            num_embeddings = [num_embeddings]
        if not hasattr(embedding_dims, "__iter__"):
            embedding_dims = [embedding_dims]
        if len(num_embeddings) != len(embedding_dims):
            raise ValueError(
                "Need 'num_embeddings' and 'embedding_dims' to have the same length")
        num_embeddings = [int(n) for n in num_embeddings]
        embedding_dims = [int(d) for d in embedding_dims]

        # Per-feature tables with fastai init: uniform(-sc, sc), sc = 2/(dim+1).
        self.tables = []
        keys = jax.random.split(key, len(num_embeddings))
        for k, n_emb, emb_dim in zip(keys, num_embeddings, embedding_dims):
            sc = 2.0 / (emb_dim + 1)
            self.tables.append(jax.random.uniform(
                k, (n_emb, emb_dim), minval=-sc, maxval=sc, dtype=jnp.float32))

        self.num_features = len(self.tables)
        self.out_dim = int(sum(embedding_dims))
        self.table_dtype = jnp.dtype(table_dtype)

        k_sum = int(sum(num_embeddings))
        d_pad = _round_up(self.out_dim, 128)
        k_full = _round_up(k_sum, 8)
        itemsize = self.table_dtype.itemsize

        self._n_tc = _num_tensorcores()
        usable = _usable_vmem_bytes()
        self._usable_vmem = usable

        # Decide whether the whole packed table can stay resident in VMEM.
        bb_max = 256
        fixed = (2 * bb_max * _round_up(self.num_features, 128) * 4   # idx blocks
                 + 2 * bb_max * d_pad * 4                             # out blocks
                 + (8 << 20))                                         # compiler scratch slack
        budget_k = usable - fixed
        per_row_resident = d_pad * itemsize + bb_max * itemsize        # Buffered(1) + multi-hot
        per_row_streamed = 2 * d_pad * itemsize + bb_max * itemsize    # double-buffered + multi-hot

        if block_k is not None:
            bk = _round_up(int(block_k), 8)
            self.single_k = bk >= k_full
            self.block_k = k_full if self.single_k else bk
        elif budget_k >= k_full * per_row_resident:
            self.single_k = True        # table DMA'd from HBM exactly once
            self.block_k = k_full
        else:
            self.single_k = False
            bk = max(256, budget_k // max(1, per_row_streamed))
            bk = min(int(bk), k_full)
            bk = (bk // 256) * 256 if bk >= 512 else max(8, (bk // 8) * 8)
            self.block_k = int(bk)

        k_pad = _round_up(k_sum, self.block_k)

        # Pack tables block-diagonally into one lane-dense padded table.
        big = jnp.zeros((k_pad, d_pad), dtype=self.table_dtype)
        row_offsets = []
        r = c = 0
        for w in self.tables:
            n, d = w.shape
            big = big.at[r:r + n, c:c + d].set(w.astype(self.table_dtype))
            row_offsets.append(r)
            r += n
            c += d
        self.big_table = big
        self.row_offsets = jnp.asarray(row_offsets, dtype=jnp.int32)
        self.max_idx = jnp.asarray([n - 1 for n in num_embeddings], dtype=jnp.int32)

        # dropout=0.0 -> no dropout module, matching the PyTorch reference.
        self.dropout = None

        self._forward = jax.jit(functools.partial(
            _entity_embeddings_forward,
            out_dim=self.out_dim, block_k=self.block_k, single_k=self.single_k,
            n_tc=self._n_tc, usable_vmem=self._usable_vmem))

    def __call__(self, input):
        if input.shape[1] != self.num_features:
            raise RuntimeError(
                f"Got input of shape '{input.shape}', but need dim 1 to be "
                f"{self.num_features}.")
        return self._forward(input, self.big_table, self.row_offsets, self.max_idx)


def _run_case(key, batch, num_embeddings, embedding_dims, **kwargs):
    k_params, k_idx = jax.random.split(key)
    module = EntityEmbeddings(num_embeddings, embedding_dims, dropout=0.0,
                              key=k_params, **kwargs)

    n_list = num_embeddings if hasattr(num_embeddings, "__iter__") else [num_embeddings]
    idx_keys = jax.random.split(k_idx, len(n_list))
    cols = [jax.random.randint(kk, (batch,), 0, int(n_emb), dtype=jnp.int32)
            for kk, n_emb in zip(idx_keys, n_list)]
    x = jnp.stack(cols, axis=1)  # (batch, num_features) int32

    out = jax.block_until_ready(module(x))

    # Reference: plain-JAX take (nn.Embedding lookup semantics) + concat.  The one-hot
    # gather in the kernel is exact even for bf16 tables, so tolerances stay tight.
    ref = jnp.concatenate(
        [jnp.take(t.astype(module.table_dtype), x[:, i], axis=0).astype(jnp.float32)
         for i, t in enumerate(module.tables)], axis=1)
    assert out.shape == (batch, module.out_dim), out.shape
    assert jnp.allclose(out, ref, atol=1e-6), "mismatch vs reference"


if __name__ == "__main__":
    root = jax.random.PRNGKey(0)
    k_a, k_b, k_c, k_d, k_e = jax.random.split(root, 5)

    # Small config: single batch block, resident-table (single-K) fast path.
    _run_case(k_a, batch=8, num_embeddings=[10, 7, 5], embedding_dims=[4, 3, 8])

    # Larger config: batch tiling (>= 2 "parallel" blocks) with a resident table.
    _run_case(k_b, batch=300, num_embeddings=[400, 300, 50], embedding_dims=[16, 8, 24])

    # Forced small block_k exercises the multi-K streamed/accumulate path (3 K steps).
    _run_case(k_c, batch=64, num_embeddings=[400, 300, 50], embedding_dims=[16, 8, 24],
              block_k=256)

    # Scalar (non-iterable) constructor arguments, matching the PyTorch branch.
    _run_case(k_d, batch=16, num_embeddings=12, embedding_dims=6)

    # bf16 table storage: halves HBM/VMEM table traffic, native bf16 MXU path.
    _run_case(k_e, batch=32, num_embeddings=[50, 20], embedding_dims=[8, 16],
              table_dtype=jnp.bfloat16)

    print("KERNEL_OK")
</pallas_src>

<mosaic_0001>
module attributes {stable_mosaic.version = 11 : i64} {
  func.func @_fused_embedding_kernel(%arg0: i32, %arg1: memref<8x3xi32, #tpu.memory_space<vmem>>, %arg2: memref<24x128xf32, #tpu.memory_space<vmem>>, %arg3: memref<8x128xf32, #tpu.memory_space<vmem>>) attributes {dimension_semantics = [#tpu.dimension_semantics<parallel>], iteration_bounds = array<i64: 1>, scalar_prefetch = 0 : i64, scratch_operands = 0 : i64, tpu.core_type = #tpu.core_type<tc>, window_params = [{transform_indices = @transform_0, window_bounds = array<i64: 8, 3>}, {pipeline_mode = #tpu.pipeline_mode<synchronous>, transform_indices = @transform_1, window_bounds = array<i64: 24, 128>}, {transform_indices = @transform_2, window_bounds = array<i64: 8, 128>}]} {
    %c0 = arith.constant 0 : index
    %c0_0 = arith.constant 0 : index
    %0 = vector.load %arg1[%c0, %c0_0] : memref<8x3xi32, #tpu.memory_space<vmem>>, vector<8x3xi32>
    %1 = tpu.iota {dimensions = array<i32: 1>} : vector<8x24xi32>
    %2 = vector.extract_strided_slice %0 {offsets = [0, 0], sizes = [8, 1], strides = [1, 1]} : vector<8x3xi32> to vector<8x1xi32>
    %3 = vector.broadcast %2 : vector<8x1xi32> to vector<8x24xi32>
    %4 = arith.cmpi eq, %1, %3 : vector<8x24xi32>
    %5 = vector.extract_strided_slice %0 {offsets = [0, 1], sizes = [8, 1], strides = [1, 1]} : vector<8x3xi32> to vector<8x1xi32>
    %6 = vector.broadcast %5 : vector<8x1xi32> to vector<8x24xi32>
    %7 = arith.cmpi eq, %1, %6 : vector<8x24xi32>
    %8 = arith.ori %4, %7 : vector<8x24xi1>
    %9 = vector.extract_strided_slice %0 {offsets = [0, 2], sizes = [8, 1], strides = [1, 1]} : vector<8x3xi32> to vector<8x1xi32>
    %10 = vector.broadcast %9 : vector<8x1xi32> to vector<8x24xi32>
    %11 = arith.cmpi eq, %1, %10 : vector<8x24xi32>
    %12 = arith.ori %8, %11 : vector<8x24xi1>
    %13 = arith.extui %12 : vector<8x24xi1> to vector<8x24xi32>
    %14 = arith.sitofp %13 : vector<8x24xi32> to vector<8x24xf32>
    %c0_1 = arith.constant 0 : index
    %c0_2 = arith.constant 0 : index
    %15 = vector.load %arg2[%c0_1, %c0_2] : memref<24x128xf32, #tpu.memory_space<vmem>>, vector<24x128xf32>
    %cst = arith.constant dense<0.000000e+00> : vector<8x128xf32>
    %16 = tpu.matmul %14, %15, %cst {dimension_numbers = #tpu.dot_dimension_numbers<[1], [0], [0], [1], [0, 0, 1, 1], [], []>} : vector<8x24xf32>, vector<24x128xf32>, vector<8x128xf32> -> vector<8x128xf32>
    %c0_3 = arith.constant 0 : index
    %c0_4 = arith.constant 0 : index
    %17 = vector.load %arg3[%c0_3, %c0_4] : memref<8x128xf32, #tpu.memory_space<vmem>>, vector<8x128xf32>
    tpu.vector_store %arg3[%c0_3, %c0_4], %16 {strides = array<i32>} : memref<8x128xf32, #tpu.memory_space<vmem>>, vector<8x128xf32>,
    return
  }
  func.func @transform_0(%arg0: i32) -> (i32, i32) {
    %c0_i32 = arith.constant 0 : i32
    %c0_i32_0 = arith.constant 0 : i32
    return %arg0, %c0_i32 : i32, i32
  }
  func.func @transform_1(%arg0: i32) -> (i32, i32) {
    %c0_i32 = arith.constant 0 : i32
    %c0_i32_0 = arith.constant 0 : i32
    %c0_i32_1 = arith.constant 0 : i32
    return %c0_i32, %c0_i32_0 : i32, i32
  }
  func.func @transform_2(%arg0: i32) -> (i32, i32) {
    %c0_i32 = arith.constant 0 : i32
    %c0_i32_0 = arith.constant 0 : i32
    return %arg0, %c0_i32 : i32, i32
  }
}

</mosaic_0001>

<llo_original>
// kernel: _entity_embeddings_forward.1
$region0: #{_entity_embeddings_forward.1}
  #allocation0 [shape = 'u32[]', space=smem, size = 0x4, offset = 0x4, fixed_abs, tag = 'smem constant byte address 0x4 - core index']
  #allocation1 [shape = 'u32[144,128]{1,0:T(1,128)}', space=vmem, size = 0x12000, scoped, tag = 'internal scratch']
  %s0 = inlined_call_operand.vmem [shape: s32[8,3], index: 0, kind: input, shape index: {}]
  %s1 = inlined_call_operand.vmem [shape: f32[24,128], index: 1, kind: input, shape index: {}]
  %s2 = inlined_call_operand.hbm [shape: f32[8,128], index: 2, kind: output, shape index: {}]
  %s3 = sld [smem:[#allocation0]]
  $region18: #{_entity_embeddings_forward.1} parent=0
    _
  %s5 = ssub.s32 1, %s3
  %s6 = scalar_select 0, %s5, %s3
  $region1: #{_entity_embeddings_forward.1} parent=0
    #allocation2 [shape = 'u8[4096]{0}', space=vmem, size = 0x1000, scoped, tag = 'output window, operand 0, single buffered']
    #allocation3 [shape = 's32[1]{0}', space=sflag, size = 0x4, scoped, tag = 'scoped memory for _entity_embeddings_forward.1']
    %7 = vsyncpa [#allocation3], 0
    // Predicated region
    $region2: #{_entity_embeddings_forward.1} parent=1 // pred_check
      _
    $region3: #{_entity_embeddings_forward.1} parent=1 // pred_check_branch
      %9 = sbr.rel (0) target = $region5
    $region4: #{_entity_embeddings_forward.1} parent=1 // pred_region
      _
    $region5: #{_entity_embeddings_forward.1} parent=1 // pred_fallthru
      _
    // Predicated region
    $region6: #{_entity_embeddings_forward.1} parent=1 // pred_check
      _
    $region7: #{_entity_embeddings_forward.1} parent=1 // pred_check_branch
      %11 = sbr.rel (0) target = $region9
    $region8: #{_entity_embeddings_forward.1} parent=1 // pred_region
      _
    $region9: #{_entity_embeddings_forward.1} parent=1 // pred_fallthru
      _
    %v12 = vld [vmem:[%s0] sm:$0xff]
    %v13 = vlaneseq
    %v14 = vand.u32 %v13, 127
    %15 = vset.pattern.permute.xlu0 0
    %16 = vperm.xlu0 %15, %v12
    %v17 = vpop.permute.xlu0 %16
    %vm18 = vcmp.eq.s32.totalorder %v14, %v17
    %19 = vset.pattern.permute.xlu0 1
    %20 = vperm.xlu0 %19, %v12
    %v21 = vpop.permute.xlu0 %20
    %vm22 = vcmp.eq.s32.totalorder %v14, %v21
    %vm23 = vmor %vm18, %vm22
    %24 = vset.pattern.permute.xlu0 2
    %25 = vperm.xlu0 %24, %v12
    %v26 = vpop.permute.xlu0 %25
    %vm27 = vcmp.eq.s32.totalorder %v14, %v26
    %vm28 = vmor %vm23, %vm27
    %v29 = vsel %vm28, 1, 0
    %v30 = vcvt.s32.f32 %v29
    %v31 = vld [vmem:[%s1] sm:$0xff]
    %v32 = vld [vmem:[%s1 + $0x8] sm:$0xff]
    %v33 = vld [vmem:[%s1 + $0x10] sm:$0xff]
    %vm34 = vcmask 195584
    %v36 = vsel %vm34, %v30, 0
    %38 = vmatprep.subr.mxu0 0.0
    %39 = vmatpush1.msra.mxu0 %v31
    %40 = vmatprep.subr.mxu0 0.0
    %41 = vmatpush1.msra.mxu0 %v32
    %42 = vmatprep.subr.mxu0 0.0
    %43 = vmatpush1.msra.mxu0 %v33
    %44 = vmatprep.subr.mxu0 0.0
    %45 = vmatpush1.msra.mxu0 0.0
    %46 = vmatprep.subr.mxu0 0.0
    %47 = vmatpush1.msra.mxu0 0.0
    %48 = vmatprep.subr.mxu0 0.0
    %49 = vmatpush1.msra.mxu0 0.0
    %50 = vmatprep.subr.mxu0 0.0
    %51 = vmatpush1.msra.mxu0 0.0
    %52 = vmatprep.subr.mxu0 0.0
    %53 = vmatpush1.msra.mxu0 0.0
    %54 = vmatprep.subr.mxu0 0.0
    %55 = vmatpush1.msra.mxu0 0.0
    %56 = vmatprep.subr.mxu0 0.0
    %57 = vmatpush1.msra.mxu0 0.0
    %58 = vmatprep.subr.mxu0 0.0
    %59 = vmatpush1.msra.mxu0 0.0
    %60 = vmatprep.subr.mxu0 0.0
    %61 = vmatpush1.msra.mxu0 0.0
    %62 = vmatprep.subr.mxu0 0.0
    %63 = vmatpush1.msra.mxu0 0.0
    %64 = vmatprep.subr.mxu0 0.0
    %65 = vmatpush1.msra.mxu0 0.0
    %66 = vmatprep.subr.mxu0 0.0
    %67 = vmatpush1.msra.mxu0 0.0
    %68 = vmatprep.subr.mxu0 0.0
    %69 = vmatpush1.msra.mxu0 0.0
    %70 = vmatprep.subr.mxu0 0.0
    %71 = vmatpush1.msra.mxu0 0.0
    %72 = vmatprep.subr.mxu0 0.0
    %73 = vmatpush1.msra.mxu0 0.0
    %74 = vmatprep.subr.mxu0 0.0
    %75 = vmatpush1.msra.mxu0 0.0
    %76 = vmatprep.subr.mxu0 0.0
    %77 = vmatpush1.msra.mxu0 0.0
    %78 = vmatprep.subr.mxu0 0.0
    %79 = vmatpush1.msra.mxu0 0.0
    %80 = vmatprep.subr.mxu0 0.0
    %81 = vmatpush1.msra.mxu0 0.0
    %82 = vmatprep.subr.mxu0 0.0
    %83 = vmatpush1.msra.mxu0 0.0
    %84 = vmatprep.subr.mxu0 0.0
    %85 = vmatpush1.msra.mxu0 0.0
    %86 = vmatprep.subr.mxu0 0.0
    %87 = vmatpush1.msra.mxu0 0.0
    %88 = vmatprep.subr.mxu0 0.0
    %89 = vmatpush1.msra.mxu0 0.0
    %90 = vmatprep.subr.mxu0 0.0
    %91 = vmatpush1.msra.mxu0 0.0
    %92 = vmatprep.subr.mxu0 0.0
    %93 = vmatpush1.msra.mxu0 0.0
    %94 = vmatprep.subr.mxu0 0.0
    %95 = vmatpush1.msra.mxu0 0.0
    %96 = vmatprep.subr.mxu0 0.0
    %97 = vmatpush1.msra.mxu0 0.0
    %98 = vmatprep.subr.mxu0 0.0
    %99 = vmatpush1.msra.mxu0 0.0
    %100 = vmatprep.subr.mxu0 0.0
    %101 = vmatpush1.msra.mxu0 0.0
    %102 = vmatprep.mubr.f32.mxu0 0.0
    %103 = vmatmul.mubr.f32.gmra.mrb[0].mxu0 %v36
    %v104 = vpop.f32.mrb[0].mxu0
    %v105 = vadd.f32 0.0, %v104
    %v106 = vpop.f32.mrb[0].mxu0
    %107 = vdwg.mxu0
    %108 = vst [vmem:[#allocation2] sm:$0xff] %v105
    // Predicated region
    $region10: #{_entity_embeddings_forward.1} parent=1 // pred_check
      _
    $region11: #{_entity_embeddings_forward.1} parent=1 // pred_check_branch
      %110 = sbr.rel (0) target = $region13
    $region12: #{_entity_embeddings_forward.1} parent=1 // pred_region
      %s112 = ssub.s32 128, 128
      %113 = vsyncadd [#allocation3], %s112
      %s115 = sshll.u32 [#allocation2], 4
      %s116 = int_to_ptr.vmem [resolvable:$true] %s115
      %118 = dma.vmem_to_hbm [thread:$0]  %s116, 128, %s2, [#allocation3]
    $region13: #{_entity_embeddings_forward.1} parent=1 // pred_fallthru
      _
    // Predicated region
    $region14: #{_entity_embeddings_forward.1} parent=1 // pred_check
      _
    $region15: #{_entity_embeddings_forward.1} parent=1 // pred_check_branch
      %120 = sbr.rel (0) target = $region17
    $region16: #{_entity_embeddings_forward.1} parent=1 // pred_region
      %121 = dma.done [#allocation3], 128
    $region17: #{_entity_embeddings_forward.1} parent=1 // pred_fallthru
      _
    %122 = vsyncpa [#allocation3], 1

</llo_original>
